<compile_context>
chip_gen: v5e
topology: v5e:2x2
jax: 0.10.0
libtpu: 0.0.40
codegen_flags: <defaults>
</compile_context>

<pallas_src>
import functools

import jax
import jax.numpy as jnp
from jax import lax
from jax.experimental import pallas as pl
from jax.experimental.pallas import tpu as pltpu


# ---------------------------------------------------------------------------
# Fused CALayer -> PALayer -> (+x) Pallas kernel
# ---------------------------------------------------------------------------
def _ca_pa_res_kernel(r_ref, x_ref, w1_ref, b1_ref, w2_ref, b2_ref,
                      pw1_ref, pb1_ref, pw2_ref, pb2_ref, o_ref, *, tb):
    """One (TB, C, HW) batch tile: out = PALayer(CALayer(r)) + x.

    Blocks:
      r_ref / x_ref / o_ref : (TB, C, HW)  io_dtype (bf16 by default), HW on lanes
      CA params (VMEM, f32) : w1 (C//8, C), b1 (C//8, 1), w2 (C, C//8), b2 (C, 1)
      PA params             : pw1 (C//8, C), pb1 (C//8, 1)  [VMEM, f32]
                              pw2 (C//8,),   pb2 (1,)       [SMEM scalars, f32]
    """
    f32 = jnp.float32
    # Grid-invariant weights: load once per grid step (hoisted out of the loop).
    w1 = w1_ref[...]       # (C8, C)
    b1 = b1_ref[...]       # (C8, 1)
    w2 = w2_ref[...]       # (C, C8)
    b2 = b2_ref[...]       # (C, 1)
    pw1 = pw1_ref[...]     # (C8, C)
    pb1 = pb1_ref[...]     # (C8, 1)
    c8 = pw1.shape[0]

    def one_element(b):
        rb = r_ref[b].astype(f32)                               # (C, HW)
        # --- CALayer: global avg pool (one lane reduce) + 2 tiny GEMVs ------
        col = jnp.mean(rb, axis=-1, keepdims=True)              # (C, 1)
        h = jnp.maximum(
            jnp.dot(w1, col, preferred_element_type=f32) + b1, 0.0)   # (C8, 1)
        gate = jax.nn.sigmoid(
            jnp.dot(w2, h, preferred_element_type=f32) + b2)          # (C, 1)
        rc = rb * gate                                          # lane broadcast
        # --- PALayer: lane-dense MXU matmul, then VPU weighted row sum ------
        t = jnp.maximum(
            jnp.dot(pw1, rc, preferred_element_type=f32) + pb1, 0.0)  # (C8, HW)
        p_acc = pw2_ref[0] * t[0:1]                             # (1, HW)
        for k in range(1, c8):                                  # c8 is static
            p_acc = p_acc + pw2_ref[k] * t[k:k + 1]
        p = jax.nn.sigmoid(p_acc + pb2_ref[0])                  # (1, HW)
        # --- final residual --------------------------------------------------
        o_ref[b] = (rc * p + x_ref[b].astype(f32)).astype(o_ref.dtype)

    if tb <= 4:
        # Small tiles: full static unroll is cheap and gives the scheduler ILP.
        for b in range(tb):
            one_element(b)
    else:
        # Large tiles: bounded unroll so vreg live ranges / code size stay sane.
        def body(b, carry):
            one_element(b)
            return carry
        lax.fori_loop(0, tb, body, 0, unroll=2)


def _has_two_tensorcores():
    """Best-effort detection of 2-TensorCore chips (v7x)."""
    try:
        kind = jax.devices()[0].device_kind.lower()
    except Exception:
        return False
    return ("v7" in kind) or ("7x" in kind)


def _choose_batch_tile(n, per_elem_bytes, *, two_tensorcores,
                       target_bytes=6 << 20, min_block_bytes=512 << 10,
                       two_core_floor_bytes=128 << 10):
    """How many batch elements per grid step.

    The kernel is HBM-bandwidth-bound, so blocks should be ~2 MiB per array
    (~6 MiB combined for r/x/out): measured data shows ~85% of roofline at
    ~1-4 MiB per-array blocks.  Double-buffered footprint is <= 2*target
    (~12 MiB), under the scoped-VMEM limit on v5e/v6e/v7x.  Prefer >= 2 grid
    steps when blocks stay big enough; on 2-TensorCore chips (v7x) ALWAYS keep
    >= 2 steps (even small blocks) so both cores get work.  Returned tile
    always divides N.
    """
    divisors = [d for d in range(1, n + 1) if n % d == 0]
    cap = max(1, target_bytes // per_elem_bytes)
    under_cap = [d for d in divisors if d <= cap]
    tb = max(under_cap) if under_cap else 1
    floor = two_core_floor_bytes if two_tensorcores else min_block_bytes
    multi = [d for d in divisors
             if d <= cap and n // d >= 2 and d * per_elem_bytes >= floor]
    if multi:
        tb = max(multi)
    elif two_tensorcores and n >= 2:
        # v7x: a 1-step grid leaves one TensorCore idle; force >= 2 steps.
        tb = max(d for d in divisors if n // d >= 2)
    return tb


def _ca_pa_residual(r, x, params, *, io_dtype=jnp.bfloat16):
    """Pallas: out = PALayer(CALayer(r)) + x, with r, x in NCHW."""
    N, C, H, W = r.shape
    HW = H * W
    assert C % 8 == 0 and C >= 8, "CALayer/PALayer need channel divisible by 8"
    assert HW % 128 == 0, "keep H*W a multiple of 128 (lane axis)"
    C8 = C // 8

    # Stream the big activations in io_dtype (bf16 by default); math is f32.
    r3 = r.reshape(N, C, HW).astype(io_dtype)
    x3 = x.reshape(N, C, HW).astype(io_dtype)

    # 1x1-conv parameters in plain matmul form (tiny, keep f32).
    w1 = params["ca_w1"].reshape(C8, C).astype(jnp.float32)
    b1 = params["ca_b1"].reshape(C8, 1).astype(jnp.float32)
    w2 = params["ca_w2"].reshape(C, C8).astype(jnp.float32)
    b2 = params["ca_b2"].reshape(C, 1).astype(jnp.float32)
    pw1 = params["pa_w1"].reshape(C8, C).astype(jnp.float32)
    pb1 = params["pa_b1"].reshape(C8, 1).astype(jnp.float32)
    pw2 = params["pa_w2"].reshape(C8).astype(jnp.float32)     # SMEM scalars
    pb2 = params["pa_b2"].reshape(1).astype(jnp.float32)      # SMEM scalar

    per_elem_bytes = 3 * C * HW * jnp.dtype(io_dtype).itemsize   # r + x in, out
    tb = _choose_batch_tile(N, per_elem_bytes,
                            two_tensorcores=_has_two_tensorcores())
    grid = (N // tb,)

    batch = lambda n: (n, 0, 0)
    const2 = lambda n: (0, 0)
    smem_spec = pl.BlockSpec(memory_space=pltpu.MemorySpace.SMEM)

    out = pl.pallas_call(
        functools.partial(_ca_pa_res_kernel, tb=tb),
        out_shape=jax.ShapeDtypeStruct((N, C, HW), io_dtype),
        grid_spec=pltpu.PrefetchScalarGridSpec(
            num_scalar_prefetch=0,
            grid=grid,
            in_specs=[
                pl.BlockSpec((tb, C, HW), batch),   # r (conv2 output)
                pl.BlockSpec((tb, C, HW), batch),   # x (block input, residual)
                pl.BlockSpec((C8, C), const2),      # CA w1
                pl.BlockSpec((C8, 1), const2),      # CA b1
                pl.BlockSpec((C, C8), const2),      # CA w2
                pl.BlockSpec((C, 1), const2),       # CA b2
                pl.BlockSpec((C8, C), const2),      # PA w1
                pl.BlockSpec((C8, 1), const2),      # PA b1
                smem_spec,                          # PA w2 (scalars)
                smem_spec,                          # PA b2 (scalar)
            ],
            out_specs=pl.BlockSpec((tb, C, HW), batch),
        ),
        compiler_params=pltpu.CompilerParams(
            # TODO(synk): if profiling shows "parallel" does not shard the
            # batch grid axis across v7x's two TensorCores, switch to
            # CORE_PARALLEL semantics on that axis.
            dimension_semantics=("parallel",),
            # Raise v5e's 16 MiB scoped-VMEM default so ~2 MiB/array
            # double-buffered blocks fit; equals the default on v6e/v7x.
            vmem_limit_bytes=32 * 1024 * 1024),
    )(r3, x3, w1, b1, w2, b2, pw1, pb1, pw2, pb2)

    return out.reshape(N, C, H, W).astype(x.dtype)


# ---------------------------------------------------------------------------
# Full CP_Attention_block forward
# ---------------------------------------------------------------------------
def _conv2d_nchw(x, w, b, kernel_size):
    pad = kernel_size // 2
    y = lax.conv_general_dilated(
        x, w, window_strides=(1, 1),
        padding=((pad, pad), (pad, pad)),
        dimension_numbers=("NCHW", "OIHW", "NCHW"))
    return y + b.reshape(1, -1, 1, 1)


def cp_attention_block(x, params, *, kernel_size=3, io_dtype=jnp.bfloat16):
    """Forward pass matching the PyTorch CP_Attention_block (NCHW)."""
    # TODO(synk): the KxK spatial convolutions use XLA's native TPU conv
    # (lax.conv_general_dilated) rather than a hand-written Pallas im2col
    # kernel; everything after conv2 (CALayer + PALayer + residual) is Pallas.
    res = _conv2d_nchw(x, params["conv1_w"], params["conv1_b"], kernel_size)
    res = jnp.maximum(res, 0.0) + x                       # act1 + residual
    res = _conv2d_nchw(res, params["conv2_w"], params["conv2_b"], kernel_size)
    return _ca_pa_residual(res, x, params, io_dtype=io_dtype)


def cp_attention_block_ref(x, params, *, kernel_size=3):
    """Pure-JAX f32 reference matching the PyTorch forward."""
    N, C, H, W = x.shape
    C8 = C // 8
    hp = lax.Precision.HIGHEST

    res = _conv2d_nchw(x, params["conv1_w"], params["conv1_b"], kernel_size)
    res = jnp.maximum(res, 0.0) + x
    res = _conv2d_nchw(res, params["conv2_w"], params["conv2_b"], kernel_size)

    # CALayer
    y = jnp.mean(res, axis=(2, 3), keepdims=True)
    y = jnp.einsum("oc,nchw->nohw", params["ca_w1"].reshape(C8, C), y,
                   precision=hp) + params["ca_b1"].reshape(1, C8, 1, 1)
    y = jnp.maximum(y, 0.0)
    y = jnp.einsum("oc,nchw->nohw", params["ca_w2"].reshape(C, C8), y,
                   precision=hp) + params["ca_b2"].reshape(1, C, 1, 1)
    res = res * jax.nn.sigmoid(y)

    # PALayer
    p = jnp.einsum("oc,nchw->nohw", params["pa_w1"].reshape(C8, C), res,
                   precision=hp) + params["pa_b1"].reshape(1, C8, 1, 1)
    p = jnp.maximum(p, 0.0)
    p = jnp.einsum("oc,nchw->nohw", params["pa_w2"].reshape(1, C8), p,
                   precision=hp) + params["pa_b2"].reshape(1, 1, 1, 1)
    res = res * jax.nn.sigmoid(p)

    return res + x


def _make_inputs(key, n, c, h, w, k):
    keys = jax.random.split(key, 13)
    s = 0.1
    x = jax.random.normal(keys[0], (n, c, h, w), dtype=jnp.float32)
    params = {
        "conv1_w": jax.random.normal(keys[1], (c, c, k, k), jnp.float32) * s,
        "conv1_b": jax.random.normal(keys[2], (c,), jnp.float32) * s,
        "conv2_w": jax.random.normal(keys[3], (c, c, k, k), jnp.float32) * s,
        "conv2_b": jax.random.normal(keys[4], (c,), jnp.float32) * s,
        "ca_w1": jax.random.normal(keys[5], (c // 8, c, 1, 1), jnp.float32) * s,
        "ca_b1": jax.random.normal(keys[6], (c // 8,), jnp.float32) * s,
        "ca_w2": jax.random.normal(keys[7], (c, c // 8, 1, 1), jnp.float32) * s,
        "ca_b2": jax.random.normal(keys[8], (c,), jnp.float32) * s,
        "pa_w1": jax.random.normal(keys[9], (c // 8, c, 1, 1), jnp.float32) * s,
        "pa_b1": jax.random.normal(keys[10], (c // 8,), jnp.float32) * s,
        "pa_w2": jax.random.normal(keys[11], (1, c // 8, 1, 1), jnp.float32) * s,
        "pa_b2": jax.random.normal(keys[12], (1,), jnp.float32) * s,
    }
    return x, params


if __name__ == "__main__":
    # dim must be divisible by 8 (CALayer/PALayer use dim // 8); H*W = 256
    # keeps the lane axis dense.
    N, C, H, W = 2, 32, 16, 16
    K = 3
    key = jax.random.PRNGKey(0)

    # --- 1) Default bf16-I/O path (demo shapes, unrolled loop) --------------
    x, params = _make_inputs(key, N, C, H, W, K)
    out = jax.block_until_ready(cp_attention_block(x, params, kernel_size=K))
    ref = cp_attention_block_ref(x, params, kernel_size=K)
    assert out.shape == (N, C, H, W)
    # bf16 activation I/O -> loosened tolerance vs the f32 reference.
    assert jnp.allclose(out, ref, atol=5e-2, rtol=5e-2), (
        f"bf16 path mismatch, max abs err = {jnp.max(jnp.abs(out - ref))}")

    # --- 2) f32-I/O path: validates the kernel math at tight tolerance ------
    out_f32 = jax.block_until_ready(
        cp_attention_block(x, params, kernel_size=K, io_dtype=jnp.float32))
    assert jnp.allclose(out_f32, ref, atol=1e-3, rtol=1e-3), (
        f"f32 path mismatch, max abs err = {jnp.max(jnp.abs(out_f32 - ref))}")

    # --- 3) Larger batch: exercises the bounded fori_loop path (tb > 4) -----
    xb, paramsb = _make_inputs(jax.random.PRNGKey(1), 16, C, H, W, K)
    outb = jax.block_until_ready(cp_attention_block(xb, paramsb, kernel_size=K))
    refb = cp_attention_block_ref(xb, paramsb, kernel_size=K)
    assert jnp.allclose(outb, refb, atol=5e-2, rtol=5e-2), (
        f"fori path mismatch, max abs err = {jnp.max(jnp.abs(outb - refb))}")

    print("KERNEL_OK")
</pallas_src>

<mosaic_0001>
module attributes {stable_mosaic.version = 11 : i64} {
  func.func @_ca_pa_res_kernel(%arg0: i32, %arg1: memref<2x32x256xbf16, #tpu.memory_space<vmem>>, %arg2: memref<2x32x256xbf16, #tpu.memory_space<vmem>>, %arg3: memref<4x32xf32, #tpu.memory_space<vmem>>, %arg4: memref<4x1xf32, #tpu.memory_space<vmem>>, %arg5: memref<32x4xf32, #tpu.memory_space<vmem>>, %arg6: memref<32x1xf32, #tpu.memory_space<vmem>>, %arg7: memref<4x32xf32, #tpu.memory_space<vmem>>, %arg8: memref<4x1xf32, #tpu.memory_space<vmem>>, %arg9: memref<4xf32, #tpu.memory_space<smem>>, %arg10: memref<1xf32, #tpu.memory_space<smem>>, %arg11: memref<2x32x256xbf16, #tpu.memory_space<vmem>>) attributes {dimension_semantics = [#tpu.dimension_semantics<parallel>], iteration_bounds = array<i64: 1>, scalar_prefetch = 0 : i64, scratch_operands = 0 : i64, tpu.core_type = #tpu.core_type<tc>, window_params = [{transform_indices = @transform_0, window_bounds = array<i64: 2, 32, 256>}, {transform_indices = @transform_1, window_bounds = array<i64: 2, 32, 256>}, {pipeline_mode = #tpu.pipeline_mode<synchronous>, transform_indices = @transform_2, window_bounds = array<i64: 4, 32>}, {pipeline_mode = #tpu.pipeline_mode<synchronous>, transform_indices = @transform_3, window_bounds = array<i64: 4, 1>}, {pipeline_mode = #tpu.pipeline_mode<synchronous>, transform_indices = @transform_4, window_bounds = array<i64: 32, 4>}, {pipeline_mode = #tpu.pipeline_mode<synchronous>, transform_indices = @transform_5, window_bounds = array<i64: 32, 1>}, {pipeline_mode = #tpu.pipeline_mode<synchronous>, transform_indices = @transform_6, window_bounds = array<i64: 4, 32>}, {pipeline_mode = #tpu.pipeline_mode<synchronous>, transform_indices = @transform_7, window_bounds = array<i64: 4, 1>}, {transform_indices = @transform_8, window_bounds = array<i64: 4>}, {transform_indices = @transform_9, window_bounds = array<i64: 1>}, {transform_indices = @transform_10, window_bounds = array<i64: 2, 32, 256>}]} {
    %c0 = arith.constant 0 : index
    %c0_0 = arith.constant 0 : index
    %0 = vector.load %arg3[%c0, %c0_0] : memref<4x32xf32, #tpu.memory_space<vmem>>, vector<4x32xf32>
    %c0_1 = arith.constant 0 : index
    %c0_2 = arith.constant 0 : index
    %1 = vector.load %arg4[%c0_1, %c0_2] : memref<4x1xf32, #tpu.memory_space<vmem>>, vector<4x1xf32>
    %c0_3 = arith.constant 0 : index
    %c0_4 = arith.constant 0 : index
    %2 = vector.load %arg5[%c0_3, %c0_4] : memref<32x4xf32, #tpu.memory_space<vmem>>, vector<32x4xf32>
    %c0_5 = arith.constant 0 : index
    %c0_6 = arith.constant 0 : index
    %3 = vector.load %arg6[%c0_5, %c0_6] : memref<32x1xf32, #tpu.memory_space<vmem>>, vector<32x1xf32>
    %c0_7 = arith.constant 0 : index
    %c0_8 = arith.constant 0 : index
    %4 = vector.load %arg7[%c0_7, %c0_8] : memref<4x32xf32, #tpu.memory_space<vmem>>, vector<4x32xf32>
    %c0_9 = arith.constant 0 : index
    %c0_10 = arith.constant 0 : index
    %5 = vector.load %arg8[%c0_9, %c0_10] : memref<4x1xf32, #tpu.memory_space<vmem>>, vector<4x1xf32>
    %c0_11 = arith.constant 0 : index
    %c0_12 = arith.constant 0 : index
    %c0_13 = arith.constant 0 : index
    %6 = vector.load %arg1[%c0_11, %c0_12, %c0_13] : memref<2x32x256xbf16, #tpu.memory_space<vmem>>, vector<1x32x256xbf16>
    %7 = vector.shape_cast %6 : vector<1x32x256xbf16> to vector<32x256xbf16>
    %8 = arith.extf %7 : vector<32x256xbf16> to vector<32x256xf32>
    %cst = arith.constant dense<0.000000e+00> : vector<32xf32>
    %9 = vector.multi_reduction <add>, %8, %cst [1] : vector<32x256xf32> to vector<32xf32>
    %10 = vector.shape_cast %9 : vector<32xf32> to vector<32x1xf32>
    %cst_14 = arith.constant 2.560000e+02 : f32
    %11 = vector.broadcast %cst_14 : f32 to vector<32x1xf32>
    %12 = arith.divf %10, %11 : vector<32x1xf32>
    %cst_15 = arith.constant dense<0.000000e+00> : vector<4x1xf32>
    %13 = tpu.matmul %0, %12, %cst_15 {dimension_numbers = #tpu.dot_dimension_numbers<[1], [0], [0], [1], [0, 0, 1, 1], [], []>} : vector<4x32xf32>, vector<32x1xf32>, vector<4x1xf32> -> vector<4x1xf32>
    %14 = arith.addf %13, %1 : vector<4x1xf32>
    %cst_16 = arith.constant 0.000000e+00 : f32
    %15 = vector.broadcast %cst_16 : f32 to vector<4x1xf32>
    %16 = arith.maximumf %14, %15 : vector<4x1xf32>
    %cst_17 = arith.constant dense<0.000000e+00> : vector<32x1xf32>
    %17 = tpu.matmul %2, %16, %cst_17 {dimension_numbers = #tpu.dot_dimension_numbers<[1], [0], [0], [1], [0, 0, 1, 1], [], []>} : vector<32x4xf32>, vector<4x1xf32>, vector<32x1xf32> -> vector<32x1xf32>
    %18 = arith.addf %17, %3 : vector<32x1xf32>
    %19 = arith.negf %18 : vector<32x1xf32>
    %20 = math.exp %19 : vector<32x1xf32>
    %cst_18 = arith.constant 1.000000e+00 : f32
    %21 = vector.broadcast %cst_18 : f32 to vector<32x1xf32>
    %22 = arith.addf %21, %20 : vector<32x1xf32>
    %23 = arith.divf %21, %22 : vector<32x1xf32>
    %24 = vector.broadcast %23 : vector<32x1xf32> to vector<32x256xf32>
    %25 = arith.mulf %8, %24 : vector<32x256xf32>
    %cst_19 = arith.constant dense<0.000000e+00> : vector<4x256xf32>
    %26 = tpu.matmul %4, %25, %cst_19 {dimension_numbers = #tpu.dot_dimension_numbers<[1], [0], [0], [1], [0, 0, 1, 1], [], []>} : vector<4x32xf32>, vector<32x256xf32>, vector<4x256xf32> -> vector<4x256xf32>
    %27 = vector.broadcast %5 : vector<4x1xf32> to vector<4x256xf32>
    %28 = arith.addf %26, %27 : vector<4x256xf32>
    %cst_20 = arith.constant 0.000000e+00 : f32
    %29 = vector.broadcast %cst_20 : f32 to vector<4x256xf32>
    %30 = arith.maximumf %28, %29 : vector<4x256xf32>
    %c0_21 = arith.constant 0 : index
    %31 = memref.load %arg9[%c0_21] : memref<4xf32, #tpu.memory_space<smem>>
    %32 = vector.extract_strided_slice %30 {offsets = [0, 0], sizes = [1, 256], strides = [1, 1]} : vector<4x256xf32> to vector<1x256xf32>
    %33 = vector.broadcast %31 : f32 to vector<1x256xf32>
    %34 = arith.mulf %33, %32 : vector<1x256xf32>
    %c1 = arith.constant 1 : index
    %35 = memref.load %arg9[%c1] : memref<4xf32, #tpu.memory_space<smem>>
    %36 = vector.extract_strided_slice %30 {offsets = [1, 0], sizes = [1, 256], strides = [1, 1]} : vector<4x256xf32> to vector<1x256xf32>
    %37 = vector.broadcast %35 : f32 to vector<1x256xf32>
    %38 = arith.mulf %37, %36 : vector<1x256xf32>
    %39 = arith.addf %34, %38 : vector<1x256xf32>
    %c2 = arith.constant 2 : index
    %40 = memref.load %arg9[%c2] : memref<4xf32, #tpu.memory_space<smem>>
    %41 = vector.extract_strided_slice %30 {offsets = [2, 0], sizes = [1, 256], strides = [1, 1]} : vector<4x256xf32> to vector<1x256xf32>
    %42 = vector.broadcast %40 : f32 to vector<1x256xf32>
    %43 = arith.mulf %42, %41 : vector<1x256xf32>
    %44 = arith.addf %39, %43 : vector<1x256xf32>
    %c3 = arith.constant 3 : index
    %45 = memref.load %arg9[%c3] : memref<4xf32, #tpu.memory_space<smem>>
    %46 = vector.extract_strided_slice %30 {offsets = [3, 0], sizes = [1, 256], strides = [1, 1]} : vector<4x256xf32> to vector<1x256xf32>
    %47 = vector.broadcast %45 : f32 to vector<1x256xf32>
    %48 = arith.mulf %47, %46 : vector<1x256xf32>
    %49 = arith.addf %44, %48 : vector<1x256xf32>
    %c0_22 = arith.constant 0 : index
    %50 = memref.load %arg10[%c0_22] : memref<1xf32, #tpu.memory_space<smem>>
    %51 = vector.broadcast %50 : f32 to vector<1x256xf32>
    %52 = arith.addf %49, %51 : vector<1x256xf32>
    %53 = arith.negf %52 : vector<1x256xf32>
    %54 = math.exp %53 : vector<1x256xf32>
    %cst_23 = arith.constant 1.000000e+00 : f32
    %55 = vector.broadcast %cst_23 : f32 to vector<1x256xf32>
    %56 = arith.addf %55, %54 : vector<1x256xf32>
    %57 = arith.divf %55, %56 : vector<1x256xf32>
    %58 = vector.broadcast %57 : vector<1x256xf32> to vector<32x256xf32>
    %59 = arith.mulf %25, %58 : vector<32x256xf32>
    %c0_24 = arith.constant 0 : index
    %c0_25 = arith.constant 0 : index
    %c0_26 = arith.constant 0 : index
    %60 = vector.load %arg2[%c0_24, %c0_25, %c0_26] : memref<2x32x256xbf16, #tpu.memory_space<vmem>>, vector<1x32x256xbf16>
    %61 = vector.shape_cast %60 : vector<1x32x256xbf16> to vector<32x256xbf16>
    %62 = arith.extf %61 : vector<32x256xbf16> to vector<32x256xf32>
    %63 = arith.addf %59, %62 : vector<32x256xf32>
    %64 = arith.truncf %63 : vector<32x256xf32> to vector<32x256xbf16>
    %c0_27 = arith.constant 0 : index
    %c0_28 = arith.constant 0 : index
    %c0_29 = arith.constant 0 : index
    %65 = vector.load %arg11[%c0_27, %c0_28, %c0_29] : memref<2x32x256xbf16, #tpu.memory_space<vmem>>, vector<1x32x256xbf16>
    %66 = vector.shape_cast %65 : vector<1x32x256xbf16> to vector<32x256xbf16>
    %67 = vector.shape_cast %64 : vector<32x256xbf16> to vector<1x32x256xbf16>
    tpu.vector_store %arg11[%c0_27, %c0_28, %c0_29], %67 {strides = array<i32>} : memref<2x32x256xbf16, #tpu.memory_space<vmem>>, vector<1x32x256xbf16>,
    %c1_30 = arith.constant 1 : index
    %c0_31 = arith.constant 0 : index
    %c0_32 = arith.constant 0 : index
    %68 = vector.load %arg1[%c1_30, %c0_31, %c0_32] : memref<2x32x256xbf16, #tpu.memory_space<vmem>>, vector<1x32x256xbf16>
    %69 = vector.shape_cast %68 : vector<1x32x256xbf16> to vector<32x256xbf16>
    %70 = arith.extf %69 : vector<32x256xbf16> to vector<32x256xf32>
    %cst_33 = arith.constant dense<0.000000e+00> : vector<32xf32>
    %71 = vector.multi_reduction <add>, %70, %cst_33 [1] : vector<32x256xf32> to vector<32xf32>
    %72 = vector.shape_cast %71 : vector<32xf32> to vector<32x1xf32>
    %cst_34 = arith.constant 2.560000e+02 : f32
    %73 = vector.broadcast %cst_34 : f32 to vector<32x1xf32>
    %74 = arith.divf %72, %73 : vector<32x1xf32>
    %cst_35 = arith.constant dense<0.000000e+00> : vector<4x1xf32>
    %75 = tpu.matmul %0, %74, %cst_35 {dimension_numbers = #tpu.dot_dimension_numbers<[1], [0], [0], [1], [0, 0, 1, 1], [], []>} : vector<4x32xf32>, vector<32x1xf32>, vector<4x1xf32> -> vector<4x1xf32>
    %76 = arith.addf %75, %1 : vector<4x1xf32>
    %cst_36 = arith.constant 0.000000e+00 : f32
    %77 = vector.broadcast %cst_36 : f32 to vector<4x1xf32>
    %78 = arith.maximumf %76, %77 : vector<4x1xf32>
    %cst_37 = arith.constant dense<0.000000e+00> : vector<32x1xf32>
    %79 = tpu.matmul %2, %78, %cst_37 {dimension_numbers = #tpu.dot_dimension_numbers<[1], [0], [0], [1], [0, 0, 1, 1], [], []>} : vector<32x4xf32>, vector<4x1xf32>, vector<32x1xf32> -> vector<32x1xf32>
    %80 = arith.addf %79, %3 : vector<32x1xf32>
    %81 = arith.negf %80 : vector<32x1xf32>
    %82 = math.exp %81 : vector<32x1xf32>
    %cst_38 = arith.constant 1.000000e+00 : f32
    %83 = vector.broadcast %cst_38 : f32 to vector<32x1xf32>
    %84 = arith.addf %83, %82 : vector<32x1xf32>
    %85 = arith.divf %83, %84 : vector<32x1xf32>
    %86 = vector.broadcast %85 : vector<32x1xf32> to vector<32x256xf32>
    %87 = arith.mulf %70, %86 : vector<32x256xf32>
    %cst_39 = arith.constant dense<0.000000e+00> : vector<4x256xf32>
    %88 = tpu.matmul %4, %87, %cst_39 {dimension_numbers = #tpu.dot_dimension_numbers<[1], [0], [0], [1], [0, 0, 1, 1], [], []>} : vector<4x32xf32>, vector<32x256xf32>, vector<4x256xf32> -> vector<4x256xf32>
    %89 = vector.broadcast %5 : vector<4x1xf32> to vector<4x256xf32>
    %90 = arith.addf %88, %89 : vector<4x256xf32>
    %cst_40 = arith.constant 0.000000e+00 : f32
    %91 = vector.broadcast %cst_40 : f32 to vector<4x256xf32>
    %92 = arith.maximumf %90, %91 : vector<4x256xf32>
    %c0_41 = arith.constant 0 : index
    %93 = memref.load %arg9[%c0_41] : memref<4xf32, #tpu.memory_space<smem>>
    %94 = vector.extract_strided_slice %92 {offsets = [0, 0], sizes = [1, 256], strides = [1, 1]} : vector<4x256xf32> to vector<1x256xf32>
    %95 = vector.broadcast %93 : f32 to vector<1x256xf32>
    %96 = arith.mulf %95, %94 : vector<1x256xf32>
    %c1_42 = arith.constant 1 : index
    %97 = memref.load %arg9[%c1_42] : memref<4xf32, #tpu.memory_space<smem>>
    %98 = vector.extract_strided_slice %92 {offsets = [1, 0], sizes = [1, 256], strides = [1, 1]} : vector<4x256xf32> to vector<1x256xf32>
    %99 = vector.broadcast %97 : f32 to vector<1x256xf32>
    %100 = arith.mulf %99, %98 : vector<1x256xf32>
    %101 = arith.addf %96, %100 : vector<1x256xf32>
    %c2_43 = arith.constant 2 : index
    %102 = memref.load %arg9[%c2_43] : memref<4xf32, #tpu.memory_space<smem>>
    %103 = vector.extract_strided_slice %92 {offsets = [2, 0], sizes = [1, 256], strides = [1, 1]} : vector<4x256xf32> to vector<1x256xf32>
    %104 = vector.broadcast %102 : f32 to vector<1x256xf32>
    %105 = arith.mulf %104, %103 : vector<1x256xf32>
    %106 = arith.addf %101, %105 : vector<1x256xf32>
    %c3_44 = arith.constant 3 : index
    %107 = memref.load %arg9[%c3_44] : memref<4xf32, #tpu.memory_space<smem>>
    %108 = vector.extract_strided_slice %92 {offsets = [3, 0], sizes = [1, 256], strides = [1, 1]} : vector<4x256xf32> to vector<1x256xf32>
    %109 = vector.broadcast %107 : f32 to vector<1x256xf32>
    %110 = arith.mulf %109, %108 : vector<1x256xf32>
    %111 = arith.addf %106, %110 : vector<1x256xf32>
    %c0_45 = arith.constant 0 : index
    %112 = memref.load %arg10[%c0_45] : memref<1xf32, #tpu.memory_space<smem>>
    %113 = vector.broadcast %112 : f32 to vector<1x256xf32>
    %114 = arith.addf %111, %113 : vector<1x256xf32>
    %115 = arith.negf %114 : vector<1x256xf32>
    %116 = math.exp %115 : vector<1x256xf32>
    %cst_46 = arith.constant 1.000000e+00 : f32
    %117 = vector.broadcast %cst_46 : f32 to vector<1x256xf32>
    %118 = arith.addf %117, %116 : vector<1x256xf32>
    %119 = arith.divf %117, %118 : vector<1x256xf32>
    %120 = vector.broadcast %119 : vector<1x256xf32> to vector<32x256xf32>
    %121 = arith.mulf %87, %120 : vector<32x256xf32>
    %c1_47 = arith.constant 1 : index
    %c0_48 = arith.constant 0 : index
    %c0_49 = arith.constant 0 : index
    %122 = vector.load %arg2[%c1_47, %c0_48, %c0_49] : memref<2x32x256xbf16, #tpu.memory_space<vmem>>, vector<1x32x256xbf16>
    %123 = vector.shape_cast %122 : vector<1x32x256xbf16> to vector<32x256xbf16>
    %124 = arith.extf %123 : vector<32x256xbf16> to vector<32x256xf32>
    %125 = arith.addf %121, %124 : vector<32x256xf32>
    %126 = arith.truncf %125 : vector<32x256xf32> to vector<32x256xbf16>
    %c1_50 = arith.constant 1 : index
    %c0_51 = arith.constant 0 : index
    %c0_52 = arith.constant 0 : index
    %127 = vector.load %arg11[%c1_50, %c0_51, %c0_52] : memref<2x32x256xbf16, #tpu.memory_space<vmem>>, vector<1x32x256xbf16>
    %128 = vector.shape_cast %127 : vector<1x32x256xbf16> to vector<32x256xbf16>
    %129 = vector.shape_cast %126 : vector<32x256xbf16> to vector<1x32x256xbf16>
    tpu.vector_store %arg11[%c1_50, %c0_51, %c0_52], %129 {strides = array<i32>} : memref<2x32x256xbf16, #tpu.memory_space<vmem>>, vector<1x32x256xbf16>,
    return
  }
  func.func @transform_0(%arg0: i32) -> (i32, i32, i32) {
    %c0_i32 = arith.constant 0 : i32
    %c0_i32_0 = arith.constant 0 : i32
    %c0_i32_1 = arith.constant 0 : i32
    return %arg0, %c0_i32, %c0_i32_0 : i32, i32, i32
  }
  func.func @transform_1(%arg0: i32) -> (i32, i32, i32) {
    %c0_i32 = arith.constant 0 : i32
    %c0_i32_0 = arith.constant 0 : i32
    %c0_i32_1 = arith.constant 0 : i32
    return %arg0, %c0_i32, %c0_i32_0 : i32, i32, i32
  }
  func.func @transform_2(%arg0: i32) -> (i32, i32) {
    %c0_i32 = arith.constant 0 : i32
    %c0_i32_0 = arith.constant 0 : i32
    %c0_i32_1 = arith.constant 0 : i32
    return %c0_i32, %c0_i32_0 : i32, i32
  }
  func.func @transform_3(%arg0: i32) -> (i32, i32) {
    %c0_i32 = arith.constant 0 : i32
    %c0_i32_0 = arith.constant 0 : i32
    %c0_i32_1 = arith.constant 0 : i32
    return %c0_i32, %c0_i32_0 : i32, i32
  }
  func.func @transform_4(%arg0: i32) -> (i32, i32) {
    %c0_i32 = arith.constant 0 : i32
    %c0_i32_0 = arith.constant 0 : i32
    %c0_i32_1 = arith.constant 0 : i32
    return %c0_i32, %c0_i32_0 : i32, i32
  }
  func.func @transform_5(%arg0: i32) -> (i32, i32) {
    %c0_i32 = arith.constant 0 : i32
    %c0_i32_0 = arith.constant 0 : i32
    %c0_i32_1 = arith.constant 0 : i32
    return %c0_i32, %c0_i32_0 : i32, i32
  }
  func.func @transform_6(%arg0: i32) -> (i32, i32) {
    %c0_i32 = arith.constant 0 : i32
    %c0_i32_0 = arith.constant 0 : i32
    %c0_i32_1 = arith.constant 0 : i32
    return %c0_i32, %c0_i32_0 : i32, i32
  }
  func.func @transform_7(%arg0: i32) -> (i32, i32) {
    %c0_i32 = arith.constant 0 : i32
    %c0_i32_0 = arith.constant 0 : i32
    %c0_i32_1 = arith.constant 0 : i32
    return %c0_i32, %c0_i32_0 : i32, i32
  }
  func.func @transform_8(%arg0: i32) -> i32 {
    %c0_i32 = arith.constant 0 : i32
    %c0_i32_0 = arith.constant 0 : i32
    return %c0_i32 : i32
  }
  func.func @transform_9(%arg0: i32) -> i32 {
    %c0_i32 = arith.constant 0 : i32
    %c0_i32_0 = arith.constant 0 : i32
    return %c0_i32 : i32
  }
  func.func @transform_10(%arg0: i32) -> (i32, i32, i32) {
    %c0_i32 = arith.constant 0 : i32
    %c0_i32_0 = arith.constant 0 : i32
    %c0_i32_1 = arith.constant 0 : i32
    return %arg0, %c0_i32, %c0_i32_0 : i32, i32, i32
  }
}

</mosaic_0001>

<llo_original>
// kernel: tpu_custom_call.1
$region0: #{tpu_custom_call.1}
  #allocation0 [shape = 'u32[]', space=smem, size = 0x4, offset = 0x4, fixed_abs, tag = 'smem constant byte address 0x4 - core index']
  #allocation1 [shape = 'u32[72,128]{1,0:T(1,128)}', space=vmem, size = 0x9000, scoped, tag = 'internal scratch']
  #allocation2 [shape = 'f32[1]{0:T(128)S(6)}', space=smem, size = 0x200, scoped, tag = 'scoped memory for tpu_custom_call.1']
  %s0 = inlined_call_operand.vmem [shape: bf16[2,32,256], index: 0, kind: input, shape index: {}]
  %s1 = inlined_call_operand.hbm [shape: bf16[2,32,256], index: 1, kind: input, shape index: {}]
  %s2 = inlined_call_operand.vmem [shape: f32[4,32], index: 2, kind: input, shape index: {}]
  %s3 = inlined_call_operand.vmem [shape: f32[4,1], index: 3, kind: input, shape index: {}]
  %s4 = inlined_call_operand.vmem [shape: f32[32,4], index: 4, kind: input, shape index: {}]
  %s5 = inlined_call_operand.vmem [shape: f32[32,1], index: 5, kind: input, shape index: {}]
  %s6 = inlined_call_operand.vmem [shape: f32[4,32], index: 6, kind: input, shape index: {}]
  %s7 = inlined_call_operand.vmem [shape: f32[4,1], index: 7, kind: input, shape index: {}]
  %s8 = inlined_call_operand.vmem [shape: f32[4], index: 8, kind: input, shape index: {}]
  %s9 = inlined_call_operand.<no memory space> [shape: f32[1], index: 9, kind: input, shape index: {}]
  %s10 = inlined_call_operand.hbm [shape: bf16[2,32,256], index: 10, kind: output, shape index: {}]
  %s11 = sld [smem:[#allocation0]]
  $region58: #{tpu_custom_call.1} parent=0
    _
  %s13 = ssub.s32 1, %s11
  %s14 = scalar_select 0, %s13, %s11
  %15 = sst [smem:[#allocation2]] %s9
  $region1: #{tpu_custom_call.1} parent=0
    #allocation3 [shape = 'u8[32768]{0}', space=vmem, size = 0x8000, scoped, tag = 'input window, operand 1, single buffered']
    #allocation4 [shape = 's32[1]{0}', space=sflag, size = 0x4, scoped, tag = 'scoped memory for tpu_custom_call.1']
    #allocation5 [shape = 's32[1]{0}', space=sflag, size = 0x4, scoped, tag = 'scoped memory for tpu_custom_call.1']
    #allocation6 [shape = 's32[1]{0}', space=sflag, size = 0x4, scoped, tag = 'scoped memory for tpu_custom_call.1']
    #allocation7 [shape = 'u8[512]{0}', space=smem, size = 0x200, scoped, tag = 'input window, operand 8, single buffered']
    #allocation8 [shape = 'u8[32768]{0}', space=vmem, size = 0x8000, scoped, tag = 'output window, operand 0, single buffered']
    %16 = vsyncpa [#allocation4], 0
    %17 = vsyncpa [#allocation6], 0
    %18 = vsyncpa [#allocation5], 0
    // Predicated region
    $region2: #{tpu_custom_call.1} parent=1 // pred_check
      _
    $region3: #{tpu_custom_call.1} parent=1 // pred_check_branch
      %20 = sbr.rel (0) target = $region5
    $region4: #{tpu_custom_call.1} parent=1 // pred_region
      _
    $region5: #{tpu_custom_call.1} parent=1 // pred_fallthru
      _
    // Predicated region
    $region6: #{tpu_custom_call.1} parent=1 // pred_check
      _
    $region7: #{tpu_custom_call.1} parent=1 // pred_check_branch
      %22 = sbr.rel (0) target = $region9
    $region8: #{tpu_custom_call.1} parent=1 // pred_region
      %24 = vsyncadd [#allocation4], 0
      %s25 = sshll.u32 %s1, 4
      %s26 = int_to_ptr.hbm [resolvable:$true] %s25
      %s27 = sshll.u32 [#allocation3], 4
      %s28 = int_to_ptr.vmem [resolvable:$true] %s27
      %33 = dma.hbm_to_vmem [thread:$0]  %s26, 1024, %s28, [#allocation4], 128, 128, 8
    $region9: #{tpu_custom_call.1} parent=1 // pred_fallthru
      _
    // Predicated region
    $region10: #{tpu_custom_call.1} parent=1 // pred_check
      _
    $region11: #{tpu_custom_call.1} parent=1 // pred_check_branch
      %35 = sbr.rel (0) target = $region13
    $region12: #{tpu_custom_call.1} parent=1 // pred_region
      _
    $region13: #{tpu_custom_call.1} parent=1 // pred_fallthru
      _
    // Predicated region
    $region14: #{tpu_custom_call.1} parent=1 // pred_check
      _
    $region15: #{tpu_custom_call.1} parent=1 // pred_check_branch
      %37 = sbr.rel (0) target = $region17
    $region16: #{tpu_custom_call.1} parent=1 // pred_region
      _
    $region17: #{tpu_custom_call.1} parent=1 // pred_fallthru
      _
    // Predicated region
    $region18: #{tpu_custom_call.1} parent=1 // pred_check
      _
    $region19: #{tpu_custom_call.1} parent=1 // pred_check_branch
      %39 = sbr.rel (0) target = $region21
    $region20: #{tpu_custom_call.1} parent=1 // pred_region
      _
    $region21: #{tpu_custom_call.1} parent=1 // pred_fallthru
      _
    // Predicated region
    $region22: #{tpu_custom_call.1} parent=1 // pred_check
      _
    $region23: #{tpu_custom_call.1} parent=1 // pred_check_branch
      %41 = sbr.rel (0) target = $region25
    $region24: #{tpu_custom_call.1} parent=1 // pred_region
      _
    $region25: #{tpu_custom_call.1} parent=1 // pred_fallthru
      _
    // Predicated region
    $region26: #{tpu_custom_call.1} parent=1 // pred_check
      _
    $region27: #{tpu_custom_call.1} parent=1 // pred_check_branch
      %43 = sbr.rel (0) target = $region29
    $region28: #{tpu_custom_call.1} parent=1 // pred_region
      _
    $region29: #{tpu_custom_call.1} parent=1 // pred_fallthru
      _
    // Predicated region
    $region30: #{tpu_custom_call.1} parent=1 // pred_check
      _
    $region31: #{tpu_custom_call.1} parent=1 // pred_check_branch
      %45 = sbr.rel (0) target = $region33
    $region32: #{tpu_custom_call.1} parent=1 // pred_region
      _
    $region33: #{tpu_custom_call.1} parent=1 // pred_fallthru
      _
    // Predicated region
    $region34: #{tpu_custom_call.1} parent=1 // pred_check
      _
    $region35: #{tpu_custom_call.1} parent=1 // pred_check_branch
      %47 = sbr.rel (0) target = $region37
    $region36: #{tpu_custom_call.1} parent=1 // pred_region
      %49 = vsyncadd [#allocation6], 0
      %s51 = sshll.u32 %s8, 4
      %s52 = int_to_ptr.vmem [resolvable:$true] %s51
      %54 = dma.vmem_to_smem %s52, 16, [#allocation7], [#allocation6]
    $region37: #{tpu_custom_call.1} parent=1 // pred_fallthru
      _
    // Predicated region
    $region38: #{tpu_custom_call.1} parent=1 // pred_check
      _
    $region39: #{tpu_custom_call.1} parent=1 // pred_check_branch
      %56 = sbr.rel (0) target = $region41
    $region40: #{tpu_custom_call.1} parent=1 // pred_region
      _
    $region41: #{tpu_custom_call.1} parent=1 // pred_fallthru
      _
    // Predicated region
    $region42: #{tpu_custom_call.1} parent=1 // pred_check
      _
    $region43: #{tpu_custom_call.1} parent=1 // pred_check_branch
      %58 = sbr.rel (0) target = $region45
    $region44: #{tpu_custom_call.1} parent=1 // pred_region
      %60 = dma.done [#allocation4], 1024
    $region45: #{tpu_custom_call.1} parent=1 // pred_fallthru
      _
    // Predicated region
    $region46: #{tpu_custom_call.1} parent=1 // pred_check
      _
    $region47: #{tpu_custom_call.1} parent=1 // pred_check_branch
      %62 = sbr.rel (0) target = $region49
    $region48: #{tpu_custom_call.1} parent=1 // pred_region
      %64 = dma.done [#allocation6], 16
    $region49: #{tpu_custom_call.1} parent=1 // pred_fallthru
      _
    %65 = sfence
    %v66 = vld [vmem:[%s2] sm:$0xf]
    %v67 = vld [vmem:[%s3] sm:$0xf]
    %v68 = vld [vmem:[%s4] sm:$0xff]
    %v69 = vld [vmem:[%s4 + $0x8] sm:$0xff]
    %v70 = vld [vmem:[%s4 + $0x10] sm:$0xff]
    %v71 = vld [vmem:[%s4 + $0x18] sm:$0xff]
    %v72 = vld [vmem:[%s5] sm:$0xff]
    %v73 = vld [vmem:[%s5 + $0x8] sm:$0xff]
    %v74 = vld [vmem:[%s5 + $0x10] sm:$0xff]
    %v75 = vld [vmem:[%s5 + $0x18] sm:$0xff]
    %v76 = vld [vmem:[%s6] sm:$0xf]
    %v77 = vld [vmem:[%s7] sm:$0xf]
    %v78 = vld [vmem:[%s0] sm:$0xff]
    %v79 = vld [vmem:[%s0 + $0x8] sm:$0xff]
    %v80 = vld [vmem:[%s0 + $0x10] sm:$0xff]
    %v81 = vld [vmem:[%s0 + $0x18] sm:$0xff]
    %v82 = vunpack.c.l.bf16 %v78
    %v83 = vunpack.c.h.bf16 %v78
    %v84 = vunpack.c.l.bf16 %v79
    %v85 = vunpack.c.h.bf16 %v79
    %v86 = vunpack.c.l.bf16 %v80
    %v87 = vunpack.c.h.bf16 %v80
    %v88 = vunpack.c.l.bf16 %v81
    %v89 = vunpack.c.h.bf16 %v81
    %v90 = vadd.f32 %v82, %v83
    %91 = vadd.xlane.f32.xlu0 %v90
    %v92 = vpop.xlane.xlu0 %91
    %v93 = vadd.f32 %v84, %v85
    %94 = vadd.xlane.f32.xlu0 %v93
    %v95 = vpop.xlane.xlu0 %94
    %v96 = vadd.f32 %v86, %v87
    %97 = vadd.xlane.f32.xlu0 %v96
    %v98 = vpop.xlane.xlu0 %97
    %v99 = vadd.f32 %v88, %v89
    %100 = vadd.xlane.f32.xlu0 %v99
    %v101 = vpop.xlane.xlu0 %100
    %v102 = vrcp.pop 256.0
    %v103 = vmul.f32 256.0, %v102
    %v104 = vsub.f32 1.0, %v103
    %v105 = vmul.f32 %v102, %v104
    %v106 = vadd.f32 %v102, %v105
    %vm107 = vweird.f32 %v102
    %v108 = vsel %vm107, %v102, %v106
    %v109 = vmul.f32 %v92, %v108
    %v110 = vmul.f32 %v95, %v108
    %v111 = vmul.f32 %v98, %v108
    %v112 = vmul.f32 %v101, %v108
    %vm113 = vcmask 261120
    %v115 = vsel %vm113, %v66, 0
    %117 = vmatpush.msra.mxu0 0.0
    %118 = vmatpush.msra.mxu0 0.0
    %119 = vmatpush.msra.mxu0 0.0
    %120 = vmatpush.msra.mxu0 0.0
    %121 = vmatpush.msra.mxu0 0.0
    %122 = vmatpush.msra.mxu0 0.0
    %123 = vmatpush.msra.mxu0 0.0
    %124 = vmatpush.msra.mxu0 0.0
    %125 = vmatpush.msra.mxu0 0.0
    %126 = vmatpush.msra.mxu0 0.0
    %127 = vmatpush.msra.mxu0 0.0
    %128 = vmatpush.msra.mxu0 0.0
    %129 = vmatpush.msra.mxu0 %v112
    %130 = vmatpush.msra.mxu0 %v111
    %131 = vmatpush.msra.mxu0 %v110
    %132 = vmatpush.msra.mxu0 %v109
    %133 = vmatmul.f32.gmra.mxu0 %v115
    %v134 = vpop.f32.mrf.mxu0
    %v135 = vadd.f32 %v67, %v134
    %136 = vdwg.mxu0
    %v137 = vmax.f32 %v135, 0.0
    %vm138 = vcmask 31744
    %v140 = vsel %vm138, %v68, 0
    %v143 = vsel %vm138, %v69, 0
    %v146 = vsel %vm138, %v70, 0
    %v149 = vsel %vm138, %v71, 0
    %vm151 = vcmask 1043456
    %v153 = vsel %vm151, %v137, 0
    %155 = vmatpush.msra.mxu0 0.0
    %156 = vmatpush.msra.mxu0 0.0
    %157 = vmatpush.msra.mxu0 0.0
    %158 = vmatpush.msra.mxu0 0.0
    %159 = vmatpush.msra.mxu0 0.0
    %160 = vmatpush.msra.mxu0 0.0
    %161 = vmatpush.msra.mxu0 0.0
    %162 = vmatpush.msra.mxu0 0.0
    %163 = vmatpush.msra.mxu0 0.0
    %164 = vmatpush.msra.mxu0 0.0
    %165 = vmatpush.msra.mxu0 0.0
    %166 = vmatpush.msra.mxu0 0.0
    %167 = vmatpush.msra.mxu0 0.0
    %168 = vmatpush.msra.mxu0 0.0
    %169 = vmatpush.msra.mxu0 0.0
    %170 = vmatpush.msra.mxu0 %v153
    %171 = vmatmul.f32.gmra.mxu0 %v140
    %v172 = vpop.f32.mrf.mxu0
    %v173 = vadd.f32 %v72, %v172
    %174 = vmatmul.f32.gmra.mxu0 %v143
    %v175 = vpop.f32.mrf.mxu0
    %v176 = vadd.f32 %v73, %v175
    %177 = vmatmul.f32.gmra.mxu0 %v146
    %v178 = vpop.f32.mrf.mxu0
    %v179 = vadd.f32 %v74, %v178
    %180 = vmatmul.f32.gmra.mxu0 %v149
    %v181 = vpop.f32.mrf.mxu0
    %v182 = vadd.f32 %v75, %v181
    %183 = vdwg.mxu0
    %v184 = vxor.u32 %v173, 2147483648
    %v185 = vxor.u32 %v176, 2147483648
    %v186 = vxor.u32 %v179, 2147483648
    %v187 = vxor.u32 %v182, 2147483648
    %v188 = vmul.f32 %v184, 1.442695
    %v189 = vpow.pop %v188
    %v190 = vmul.f32 %v185, 1.442695
    %v191 = vpow.pop %v190
    %v192 = vmul.f32 %v186, 1.442695
    %v193 = vpow.pop %v192
    %v194 = vmul.f32 %v187, 1.442695
    %v195 = vpow.pop %v194
    %v196 = vadd.f32 %v189, 1.0
    %v197 = vadd.f32 %v191, 1.0
    %v198 = vadd.f32 %v193, 1.0
    %v199 = vadd.f32 %v195, 1.0
    %v200 = vrcp.pop %v196
    %v201 = vmul.f32 %v196, %v200
    %v202 = vsub.f32 1.0, %v201
    %v203 = vmul.f32 %v200, %v202
    %v204 = vadd.f32 %v200, %v203
    %vm205 = vweird.f32 %v196
    %vm206 = vweird.f32 %v200
    %vm207 = vmor %vm205, %vm206
    %v208 = vsel %vm207, %v200, %v204
    %v209 = vand.u32 2147483647, %v196
    %vm210 = vcmp.eq.f32.partialorder %v209, 8.507059e+37
    %v211 = vand.u32 %v196, 2147483648
    %v212 = vor.u32 1.1754944e-38, %v211
    %v213 = vsel %vm210, %v212, %v208
    %v214 = vmul.f32 1.0, %v213
    %v215 = vrcp.pop %v197
    %v216 = vmul.f32 %v197, %v215
    %v217 = vsub.f32 1.0, %v216
    %v218 = vmul.f32 %v215, %v217
    %v219 = vadd.f32 %v215, %v218
    %vm220 = vweird.f32 %v197
    %vm221 = vweird.f32 %v215
    %vm222 = vmor %vm220, %vm221
    %v223 = vsel %vm222, %v215, %v219
    %v224 = vand.u32 2147483647, %v197
    %vm225 = vcmp.eq.f32.partialorder %v224, 8.507059e+37
    %v226 = vand.u32 %v197, 2147483648
    %v227 = vor.u32 1.1754944e-38, %v226
    %v228 = vsel %vm225, %v227, %v223
    %v229 = vmul.f32 1.0, %v228
    %v230 = vrcp.pop %v198
    %v231 = vmul.f32 %v198, %v230
    %v232 = vsub.f32 1.0, %v231
    %v233 = vmul.f32 %v230, %v232
    %v234 = vadd.f32 %v230, %v233
    %vm235 = vweird.f32 %v198
    %vm236 = vweird.f32 %v230
    %vm237 = vmor %vm235, %vm236
    %v238 = vsel %vm237, %v230, %v234
    %v239 = vand.u32 2147483647, %v198
    %vm240 = vcmp.eq.f32.partialorder %v239, 8.507059e+37
    %v241 = vand.u32 %v198, 2147483648
    %v242 = vor.u32 1.1754944e-38, %v241
    %v243 = vsel %vm240, %v242, %v238
    %v244 = vmul.f32 1.0, %v243
    %v245 = vrcp.pop %v199
    %v246 = vmul.f32 %v199, %v245
    %v247 = vsub.f32 1.0, %v246
    %v248 = vmul.f32 %v245, %v247
    %v249 = vadd.f32 %v245, %v248
    %vm250 = vweird.f32 %v199
    %vm251 = vweird.f32 %v245
    %vm252 = vmor %vm250, %vm251
    %v253 = vsel %vm252, %v245, %v249
    %v254 = vand.u32 2147483647, %v199
    %vm255 = vcmp.eq.f32.partialorder %v254, 8.507059e+37
    %v256 = vand.u32 %v199, 2147483648
    %v257 = vor.u32 1.1754944e-38, %v256
    %v258 = vsel %vm255, %v257, %v253
    %v259 = vmul.f32 1.0, %v258
    %261 = vset.pattern.permute.xlu0 0
    %262 = vperm.xlu0 %261, %v214
    %v263 = vpop.permute.xlu0 %262
    %266 = vset.pattern.permute.xlu0 0
    %267 = vperm.xlu0 %266, %v229
    %v268 = vpop.permute.xlu0 %267
    %271 = vset.pattern.permute.xlu0 0
    %272 = vperm.xlu0 %271, %v244
    %v273 = vpop.permute.xlu0 %272
    %276 = vset.pattern.permute.xlu0 0
    %277 = vperm.xlu0 %276, %v259
    %v278 = vpop.permute.xlu0 %277
    %v280 = vmul.f32 %v82, %v263
    %v281 = vmul.f32 %v83, %v263
    %v282 = vmul.f32 %v84, %v268
    %v283 = vmul.f32 %v85, %v268
    %v284 = vmul.f32 %v86, %v273
    %v285 = vmul.f32 %v87, %v273
    %v286 = vmul.f32 %v88, %v278
    %v287 = vmul.f32 %v89, %v278
    %289 = vset.pattern.permute.xlu0 0
    %290 = vperm.xlu0 %289, %v77
    %v291 = vpop.permute.xlu0 %290
    %v294 = vsel %vm113, %v76, 0
    %296 = vmatpush.msra.mxu0 0.0
    %297 = vmatpush.msra.mxu0 0.0
    %298 = vmatpush.msra.mxu0 0.0
    %299 = vmatpush.msra.mxu0 0.0
    %300 = vmatpush.msra.mxu0 0.0
    %301 = vmatpush.msra.mxu0 0.0
    %302 = vmatpush.msra.mxu0 0.0
    %303 = vmatpush.msra.mxu0 0.0
    %304 = vmatpush.msra.mxu0 0.0
    %305 = vmatpush.msra.mxu0 0.0
    %306 = vmatpush.msra.mxu0 0.0
    %307 = vmatpush.msra.mxu0 0.0
    %308 = vmatpush.msra.mxu0 %v286
    %309 = vmatpush.msra.mxu0 %v284
    %310 = vmatpush.msra.mxu0 %v282
    %311 = vmatpush.msra.mxu0 %v280
    %312 = vmatmul.f32.gmra.mxu0 %v294
    %v313 = vpop.f32.mrf.mxu0
    %v314 = vadd.f32 %v291, %v313
    %315 = vdwg.mxu0
    %316 = vmatpush.msra.mxu0 0.0
    %317 = vmatpush.msra.mxu0 0.0
    %318 = vmatpush.msra.mxu0 0.0
    %319 = vmatpush.msra.mxu0 0.0
    %320 = vmatpush.msra.mxu0 0.0
    %321 = vmatpush.msra.mxu0 0.0
    %322 = vmatpush.msra.mxu0 0.0
    %323 = vmatpush.msra.mxu0 0.0
    %324 = vmatpush.msra.mxu0 0.0
    %325 = vmatpush.msra.mxu0 0.0
    %326 = vmatpush.msra.mxu0 0.0
    %327 = vmatpush.msra.mxu0 0.0
    %328 = vmatpush.msra.mxu0 %v287
    %329 = vmatpush.msra.mxu0 %v285
    %330 = vmatpush.msra.mxu0 %v283
    %331 = vmatpush.msra.mxu0 %v281
    %332 = vmatmul.f32.gmra.mxu0 %v294
    %v333 = vpop.f32.mrf.mxu0
    %v334 = vadd.f32 %v291, %v333
    %335 = vdwg.mxu0
    %v336 = vmax.f32 %v314, 0.0
    %v337 = vmax.f32 %v334, 0.0
    %s338 = sld [smem:[#allocation7]]
    %v339 = vstv %s338
    %v340 = vmul.f32 %v339, %v336
    %v341 = vmul.f32 %v339, %v337
    %s342 = sld [smem:[#allocation7 + $0x1]]
    %v343 = vstv %s342
    %v344 = vmul.f32 %v343, %v336
    %v345 = vmul.f32 %v343, %v337
    %v348 = vrot.slane %v344, 1
    %v349 = vrot.slane %v345, 1
    %v352 = vadd.f32 %v340, %v348
    %v353 = vadd.f32 %v341, %v349
    %s354 = sld [smem:[#allocation7 + $0x2]]
    %v355 = vstv %s354
    %v356 = vmul.f32 %v355, %v336
    %v357 = vmul.f32 %v355, %v337
    %v360 = vrot.slane %v356, 2
    %v361 = vrot.slane %v357, 2
    %v364 = vadd.f32 %v352, %v360
    %v365 = vadd.f32 %v353, %v361
    %s366 = sld [smem:[#allocation7 + $0x3]]
    %v367 = vstv %s366
    %v368 = vmul.f32 %v367, %v336
    %v369 = vmul.f32 %v367, %v337
    %v372 = vrot.slane %v368, 3
    %v373 = vrot.slane %v369, 3
    %v376 = vadd.f32 %v364, %v372
    %v377 = vadd.f32 %v365, %v373
    %s378 = sld [smem:[#allocation2]]
    %v379 = vstv %s378
    %v380 = vadd.f32 %v376, %v379
    %v381 = vadd.f32 %v377, %v379
    %v382 = vxor.u32 %v380, 2147483648
    %v383 = vxor.u32 %v381, 2147483648
    %v384 = vmul.f32 %v382, 1.442695
    %v385 = vpow.pop %v384
    %v386 = vmul.f32 %v383, 1.442695
    %v387 = vpow.pop %v386
    %v388 = vadd.f32 %v385, 1.0
    %v389 = vadd.f32 %v387, 1.0
    %v390 = vrcp.pop %v388
    %v391 = vmul.f32 %v388, %v390
    %v392 = vsub.f32 1.0, %v391
    %v393 = vmul.f32 %v390, %v392
    %v394 = vadd.f32 %v390, %v393
    %vm395 = vweird.f32 %v388
    %vm396 = vweird.f32 %v390
    %vm397 = vmor %vm395, %vm396
    %v398 = vsel %vm397, %v390, %v394
    %v399 = vand.u32 2147483647, %v388
    %vm400 = vcmp.eq.f32.partialorder %v399, 8.507059e+37
    %v401 = vand.u32 %v388, 2147483648
    %v402 = vor.u32 1.1754944e-38, %v401
    %v403 = vsel %vm400, %v402, %v398
    %v404 = vmul.f32 1.0, %v403
    %v405 = vrcp.pop %v389
    %v406 = vmul.f32 %v389, %v405
    %v407 = vsub.f32 1.0, %v406
    %v408 = vmul.f32 %v405, %v407
    %v409 = vadd.f32 %v405, %v408
    %vm410 = vweird.f32 %v389
    %vm411 = vweird.f32 %v405
    %vm412 = vmor %vm410, %vm411
    %v413 = vsel %vm412, %v405, %v409
    %v414 = vand.u32 2147483647, %v389
    %vm415 = vcmp.eq.f32.partialorder %v414, 8.507059e+37
    %v416 = vand.u32 %v389, 2147483648
    %v417 = vor.u32 1.1754944e-38, %v416
    %v418 = vsel %vm415, %v417, %v413
    %v419 = vmul.f32 1.0, %v418
    %v420 = vperm.slane %v404, 0
    %v421 = vperm.slane %v419, 0
    %v422 = vmul.f32 %v280, %v420
    %v423 = vmul.f32 %v281, %v421
    %v424 = vmul.f32 %v282, %v420
    %v425 = vmul.f32 %v283, %v421
    %v426 = vmul.f32 %v284, %v420
    %v427 = vmul.f32 %v285, %v421
    %v428 = vmul.f32 %v286, %v420
    %v429 = vmul.f32 %v287, %v421
    %v430 = vld [vmem:[#allocation3] sm:$0xff]
    %v431 = vld [vmem:[#allocation3 + $0x8] sm:$0xff]
    %v432 = vld [vmem:[#allocation3 + $0x10] sm:$0xff]
    %v433 = vld [vmem:[#allocation3 + $0x18] sm:$0xff]
    %v434 = vunpack.c.l.bf16 %v430
    %v435 = vunpack.c.h.bf16 %v430
    %v436 = vunpack.c.l.bf16 %v431
    %v437 = vunpack.c.h.bf16 %v431
    %v438 = vunpack.c.l.bf16 %v432
    %v439 = vunpack.c.h.bf16 %v432
    %v440 = vunpack.c.l.bf16 %v433
    %v441 = vunpack.c.h.bf16 %v433
    %v442 = vadd.f32 %v422, %v434
    %v443 = vadd.f32 %v423, %v435
    %v444 = vadd.f32 %v424, %v436
    %v445 = vadd.f32 %v425, %v437
    %v446 = vadd.f32 %v426, %v438
    %v447 = vadd.f32 %v427, %v439
    %v448 = vadd.f32 %v428, %v440
    %v449 = vadd.f32 %v429, %v441
    %v450 = vpack.c.bf16 %v443, %v442
    %v451 = vpack.c.bf16 %v445, %v444
    %v452 = vpack.c.bf16 %v447, %v446
    %v453 = vpack.c.bf16 %v449, %v448
    %454 = vst [vmem:[#allocation8] sm:$0xff] %v450
    %455 = vst [vmem:[#allocation8 + $0x8] sm:$0xff] %v451
    %456 = vst [vmem:[#allocation8 + $0x10] sm:$0xff] %v452
    %457 = vst [vmem:[#allocation8 + $0x18] sm:$0xff] %v453
    %s458 = scalar_lea.vmem %s0, 32
    %v459 = vld [vmem:[%s458] sm:$0xff]
    %v460 = vld [vmem:[%s458 + $0x8] sm:$0xff]
    %v461 = vld [vmem:[%s458 + $0x10] sm:$0xff]
    %v462 = vld [vmem:[%s458 + $0x18] sm:$0xff]
    %v463 = vunpack.c.l.bf16 %v459
    %v464 = vunpack.c.h.bf16 %v459
    %v465 = vunpack.c.l.bf16 %v460
    %v466 = vunpack.c.h.bf16 %v460
    %v467 = vunpack.c.l.bf16 %v461
    %v468 = vunpack.c.h.bf16 %v461
    %v469 = vunpack.c.l.bf16 %v462
    %v470 = vunpack.c.h.bf16 %v462
    %v471 = vadd.f32 %v463, %v464
    %472 = vadd.xlane.f32.xlu0 %v471
    %v473 = vpop.xlane.xlu0 %472
    %v474 = vadd.f32 %v465, %v466
    %475 = vadd.xlane.f32.xlu0 %v474
    %v476 = vpop.xlane.xlu0 %475
    %v477 = vadd.f32 %v467, %v468
    %478 = vadd.xlane.f32.xlu0 %v477
    %v479 = vpop.xlane.xlu0 %478
    %v480 = vadd.f32 %v469, %v470
    %481 = vadd.xlane.f32.xlu0 %v480
    %v482 = vpop.xlane.xlu0 %481
    %v483 = vmul.f32 %v473, %v108
    %v484 = vmul.f32 %v476, %v108
    %v485 = vmul.f32 %v479, %v108
    %v486 = vmul.f32 %v482, %v108
    %487 = vmatpush.msra.mxu0 0.0
    %488 = vmatpush.msra.mxu0 0.0
    %489 = vmatpush.msra.mxu0 0.0
    %490 = vmatpush.msra.mxu0 0.0
    %491 = vmatpush.msra.mxu0 0.0
    %492 = vmatpush.msra.mxu0 0.0
    %493 = vmatpush.msra.mxu0 0.0
    %494 = vmatpush.msra.mxu0 0.0
    %495 = vmatpush.msra.mxu0 0.0
    %496 = vmatpush.msra.mxu0 0.0
    %497 = vmatpush.msra.mxu0 0.0
    %498 = vmatpush.msra.mxu0 0.0
    %499 = vmatpush.msra.mxu0 %v486
    %500 = vmatpush.msra.mxu0 %v485
    %501 = vmatpush.msra.mxu0 %v484
    %502 = vmatpush.msra.mxu0 %v483
    %503 = vmatmul.f32.gmra.mxu0 %v115
    %v504 = vpop.f32.mrf.mxu0
    %v505 = vadd.f32 %v67, %v504
    %506 = vdwg.mxu0
    %v507 = vmax.f32 %v505, 0.0
    %v509 = vsel %vm151, %v507, 0
    %511 = vmatpush.msra.mxu0 0.0
    %512 = vmatpush.msra.mxu0 0.0
    %513 = vmatpush.msra.mxu0 0.0
    %514 = vmatpush.msra.mxu0 0.0
    %515 = vmatpush.msra.mxu0 0.0
    %516 = vmatpush.msra.mxu0 0.0
    %517 = vmatpush.msra.mxu0 0.0
    %518 = vmatpush.msra.mxu0 0.0
    %519 = vmatpush.msra.mxu0 0.0
    %520 = vmatpush.msra.mxu0 0.0
    %521 = vmatpush.msra.mxu0 0.0
    %522 = vmatpush.msra.mxu0 0.0
    %523 = vmatpush.msra.mxu0 0.0
    %524 = vmatpush.msra.mxu0 0.0
    %525 = vmatpush.msra.mxu0 0.0
    %526 = vmatpush.msra.mxu0 %v509
    %527 = vmatmul.f32.gmra.mxu0 %v140
    %v528 = vpop.f32.mrf.mxu0
    %v529 = vadd.f32 %v72, %v528
    %530 = vmatmul.f32.gmra.mxu0 %v143
    %v531 = vpop.f32.mrf.mxu0
    %v532 = vadd.f32 %v73, %v531
    %533 = vmatmul.f32.gmra.mxu0 %v146
    %v534 = vpop.f32.mrf.mxu0
    %v535 = vadd.f32 %v74, %v534
    %536 = vmatmul.f32.gmra.mxu0 %v149
    %v537 = vpop.f32.mrf.mxu0
    %v538 = vadd.f32 %v75, %v537
    %539 = vdwg.mxu0
    %v540 = vxor.u32 %v529, 2147483648
    %v541 = vxor.u32 %v532, 2147483648
    %v542 = vxor.u32 %v535, 2147483648
    %v543 = vxor.u32 %v538, 2147483648
    %v544 = vmul.f32 %v540, 1.442695
    %v545 = vpow.pop %v544
    %v546 = vmul.f32 %v541, 1.442695
    %v547 = vpow.pop %v546
    %v548 = vmul.f32 %v542, 1.442695
    %v549 = vpow.pop %v548
    %v550 = vmul.f32 %v543, 1.442695
    %v551 = vpow.pop %v550
    %v552 = vadd.f32 %v545, 1.0
    %v553 = vadd.f32 %v547, 1.0
    %v554 = vadd.f32 %v549, 1.0
    %v555 = vadd.f32 %v551, 1.0
    %v556 = vrcp.pop %v552
    %v557 = vmul.f32 %v552, %v556
    %v558 = vsub.f32 1.0, %v557
    %v559 = vmul.f32 %v556, %v558
    %v560 = vadd.f32 %v556, %v559
    %vm561 = vweird.f32 %v552
    %vm562 = vweird.f32 %v556
    %vm563 = vmor %vm561, %vm562
    %v564 = vsel %vm563, %v556, %v560
    %v565 = vand.u32 2147483647, %v552
    %vm566 = vcmp.eq.f32.partialorder %v565, 8.507059e+37
    %v567 = vand.u32 %v552, 2147483648
    %v568 = vor.u32 1.1754944e-38, %v567
    %v569 = vsel %vm566, %v568, %v564
    %v570 = vmul.f32 1.0, %v569
    %v571 = vrcp.pop %v553
    %v572 = vmul.f32 %v553, %v571
    %v573 = vsub.f32 1.0, %v572
    %v574 = vmul.f32 %v571, %v573
    %v575 = vadd.f32 %v571, %v574
    %vm576 = vweird.f32 %v553
    %vm577 = vweird.f32 %v571
    %vm578 = vmor %vm576, %vm577
    %v579 = vsel %vm578, %v571, %v575
    %v580 = vand.u32 2147483647, %v553
    %vm581 = vcmp.eq.f32.partialorder %v580, 8.507059e+37
    %v582 = vand.u32 %v553, 2147483648
    %v583 = vor.u32 1.1754944e-38, %v582
    %v584 = vsel %vm581, %v583, %v579
    %v585 = vmul.f32 1.0, %v584
    %v586 = vrcp.pop %v554
    %v587 = vmul.f32 %v554, %v586
    %v588 = vsub.f32 1.0, %v587
    %v589 = vmul.f32 %v586, %v588
    %v590 = vadd.f32 %v586, %v589
    %vm591 = vweird.f32 %v554
    %vm592 = vweird.f32 %v586
    %vm593 = vmor %vm591, %vm592
    %v594 = vsel %vm593, %v586, %v590
    %v595 = vand.u32 2147483647, %v554
    %vm596 = vcmp.eq.f32.partialorder %v595, 8.507059e+37
    %v597 = vand.u32 %v554, 2147483648
    %v598 = vor.u32 1.1754944e-38, %v597
    %v599 = vsel %vm596, %v598, %v594
    %v600 = vmul.f32 1.0, %v599
    %v601 = vrcp.pop %v555
    %v602 = vmul.f32 %v555, %v601
    %v603 = vsub.f32 1.0, %v602
    %v604 = vmul.f32 %v601, %v603
    %v605 = vadd.f32 %v601, %v604
    %vm606 = vweird.f32 %v555
    %vm607 = vweird.f32 %v601
    %vm608 = vmor %vm606, %vm607
    %v609 = vsel %vm608, %v601, %v605
    %v610 = vand.u32 2147483647, %v555
    %vm611 = vcmp.eq.f32.partialorder %v610, 8.507059e+37
    %v612 = vand.u32 %v555, 2147483648
    %v613 = vor.u32 1.1754944e-38, %v612
    %v614 = vsel %vm611, %v613, %v609
    %v615 = vmul.f32 1.0, %v614
    %617 = vset.pattern.permute.xlu0 0
    %618 = vperm.xlu0 %617, %v570
    %v619 = vpop.permute.xlu0 %618
    %622 = vset.pattern.permute.xlu0 0
    %623 = vperm.xlu0 %622, %v585
    %v624 = vpop.permute.xlu0 %623
    %627 = vset.pattern.permute.xlu0 0
    %628 = vperm.xlu0 %627, %v600
    %v629 = vpop.permute.xlu0 %628
    %632 = vset.pattern.permute.xlu0 0
    %633 = vperm.xlu0 %632, %v615
    %v634 = vpop.permute.xlu0 %633
    %v636 = vmul.f32 %v463, %v619
    %v637 = vmul.f32 %v464, %v619
    %v638 = vmul.f32 %v465, %v624
    %v639 = vmul.f32 %v466, %v624
    %v640 = vmul.f32 %v467, %v629
    %v641 = vmul.f32 %v468, %v629
    %v642 = vmul.f32 %v469, %v634
    %v643 = vmul.f32 %v470, %v634
    %644 = vmatpush.msra.mxu0 0.0
    %645 = vmatpush.msra.mxu0 0.0
    %646 = vmatpush.msra.mxu0 0.0
    %647 = vmatpush.msra.mxu0 0.0
    %648 = vmatpush.msra.mxu0 0.0
    %649 = vmatpush.msra.mxu0 0.0
    %650 = vmatpush.msra.mxu0 0.0
    %651 = vmatpush.msra.mxu0 0.0
    %652 = vmatpush.msra.mxu0 0.0
    %653 = vmatpush.msra.mxu0 0.0
    %654 = vmatpush.msra.mxu0 0.0
    %655 = vmatpush.msra.mxu0 0.0
    %656 = vmatpush.msra.mxu0 %v642
    %657 = vmatpush.msra.mxu0 %v640
    %658 = vmatpush.msra.mxu0 %v638
    %659 = vmatpush.msra.mxu0 %v636
    %660 = vmatmul.f32.gmra.mxu0 %v294
    %v661 = vpop.f32.mrf.mxu0
    %v662 = vadd.f32 %v291, %v661
    %663 = vdwg.mxu0
    %664 = vmatpush.msra.mxu0 0.0
    %665 = vmatpush.msra.mxu0 0.0
    %666 = vmatpush.msra.mxu0 0.0
    %667 = vmatpush.msra.mxu0 0.0
    %668 = vmatpush.msra.mxu0 0.0
    %669 = vmatpush.msra.mxu0 0.0
    %670 = vmatpush.msra.mxu0 0.0
    %671 = vmatpush.msra.mxu0 0.0
    %672 = vmatpush.msra.mxu0 0.0
    %673 = vmatpush.msra.mxu0 0.0
    %674 = vmatpush.msra.mxu0 0.0
    %675 = vmatpush.msra.mxu0 0.0
    %676 = vmatpush.msra.mxu0 %v643
    %677 = vmatpush.msra.mxu0 %v641
    %678 = vmatpush.msra.mxu0 %v639
    %679 = vmatpush.msra.mxu0 %v637
    %680 = vmatmul.f32.gmra.mxu0 %v294
    %v681 = vpop.f32.mrf.mxu0
    %v682 = vadd.f32 %v291, %v681
    %683 = vdwg.mxu0
    %v684 = vmax.f32 %v662, 0.0
    %v685 = vmax.f32 %v682, 0.0
    %s686 = sld [smem:[#allocation7]]
    %v687 = vstv %s686
    %v688 = vmul.f32 %v687, %v684
    %v689 = vmul.f32 %v687, %v685
    %s690 = sld [smem:[#allocation7 + $0x1]]
    %v691 = vstv %s690
    %v692 = vmul.f32 %v691, %v684
    %v693 = vmul.f32 %v691, %v685
    %v696 = vrot.slane %v692, 1
    %v697 = vrot.slane %v693, 1
    %v700 = vadd.f32 %v688, %v696
    %v701 = vadd.f32 %v689, %v697
    %s702 = sld [smem:[#allocation7 + $0x2]]
    %v703 = vstv %s702
    %v704 = vmul.f32 %v703, %v684
    %v705 = vmul.f32 %v703, %v685
    %v708 = vrot.slane %v704, 2
    %v709 = vrot.slane %v705, 2
    %v712 = vadd.f32 %v700, %v708
    %v713 = vadd.f32 %v701, %v709
    %s714 = sld [smem:[#allocation7 + $0x3]]
    %v715 = vstv %s714
    %v716 = vmul.f32 %v715, %v684
    %v717 = vmul.f32 %v715, %v685
    %v720 = vrot.slane %v716, 3
    %v721 = vrot.slane %v717, 3
    %v724 = vadd.f32 %v712, %v720
    %v725 = vadd.f32 %v713, %v721
    %s726 = sld [smem:[#allocation2]]
    %v727 = vstv %s726
    %v728 = vadd.f32 %v724, %v727
    %v729 = vadd.f32 %v725, %v727
    %v730 = vxor.u32 %v728, 2147483648
    %v731 = vxor.u32 %v729, 2147483648
    %v732 = vmul.f32 %v730, 1.442695
    %v733 = vpow.pop %v732
    %v734 = vmul.f32 %v731, 1.442695
    %v735 = vpow.pop %v734
    %v736 = vadd.f32 %v733, 1.0
    %v737 = vadd.f32 %v735, 1.0
    %v738 = vrcp.pop %v736
    %v739 = vmul.f32 %v736, %v738
    %v740 = vsub.f32 1.0, %v739
    %v741 = vmul.f32 %v738, %v740
    %v742 = vadd.f32 %v738, %v741
    %vm743 = vweird.f32 %v736
    %vm744 = vweird.f32 %v738
    %vm745 = vmor %vm743, %vm744
    %v746 = vsel %vm745, %v738, %v742
    %v747 = vand.u32 2147483647, %v736
    %vm748 = vcmp.eq.f32.partialorder %v747, 8.507059e+37
    %v749 = vand.u32 %v736, 2147483648
    %v750 = vor.u32 1.1754944e-38, %v749
    %v751 = vsel %vm748, %v750, %v746
    %v752 = vmul.f32 1.0, %v751
    %v753 = vrcp.pop %v737
    %v754 = vmul.f32 %v737, %v753
    %v755 = vsub.f32 1.0, %v754
    %v756 = vmul.f32 %v753, %v755
    %v757 = vadd.f32 %v753, %v756
    %vm758 = vweird.f32 %v737
    %vm759 = vweird.f32 %v753
    %vm760 = vmor %vm758, %vm759
    %v761 = vsel %vm760, %v753, %v757
    %v762 = vand.u32 2147483647, %v737
    %vm763 = vcmp.eq.f32.partialorder %v762, 8.507059e+37
    %v764 = vand.u32 %v737, 2147483648
    %v765 = vor.u32 1.1754944e-38, %v764
    %v766 = vsel %vm763, %v765, %v761
    %v767 = vmul.f32 1.0, %v766
    %v768 = vperm.slane %v752, 0
    %v769 = vperm.slane %v767, 0
    %v770 = vmul.f32 %v636, %v768
    %v771 = vmul.f32 %v637, %v769
    %v772 = vmul.f32 %v638, %v768
    %v773 = vmul.f32 %v639, %v769
    %v774 = vmul.f32 %v640, %v768
    %v775 = vmul.f32 %v641, %v769
    %v776 = vmul.f32 %v642, %v768
    %v777 = vmul.f32 %v643, %v769
    %s778 = scalar_lea.vmem [#allocation3], 32
    %v779 = vld [vmem:[%s778] sm:$0xff]
    %v780 = vld [vmem:[%s778 + $0x8] sm:$0xff]
    %v781 = vld [vmem:[%s778 + $0x10] sm:$0xff]
    %v782 = vld [vmem:[%s778 + $0x18] sm:$0xff]
    %v783 = vunpack.c.l.bf16 %v779
    %v784 = vunpack.c.h.bf16 %v779
    %v785 = vunpack.c.l.bf16 %v780
    %v786 = vunpack.c.h.bf16 %v780
    %v787 = vunpack.c.l.bf16 %v781
    %v788 = vunpack.c.h.bf16 %v781
    %v789 = vunpack.c.l.bf16 %v782
    %v790 = vunpack.c.h.bf16 %v782
    %v791 = vadd.f32 %v770, %v783
    %v792 = vadd.f32 %v771, %v784
    %v793 = vadd.f32 %v772, %v785
    %v794 = vadd.f32 %v773, %v786
    %v795 = vadd.f32 %v774, %v787
    %v796 = vadd.f32 %v775, %v788
    %v797 = vadd.f32 %v776, %v789
    %v798 = vadd.f32 %v777, %v790
    %v799 = vpack.c.bf16 %v792, %v791
    %v800 = vpack.c.bf16 %v794, %v793
    %v801 = vpack.c.bf16 %v796, %v795
    %v802 = vpack.c.bf16 %v798, %v797
    %s803 = scalar_lea.vmem [#allocation8], 32
    %804 = vst [vmem:[%s803] sm:$0xff] %v799
    %805 = vst [vmem:[%s803 + $0x8] sm:$0xff] %v800
    %806 = vst [vmem:[%s803 + $0x10] sm:$0xff] %v801
    %807 = vst [vmem:[%s803 + $0x18] sm:$0xff] %v802
    // Predicated region
    $region50: #{tpu_custom_call.1} parent=1 // pred_check
      _
    $region51: #{tpu_custom_call.1} parent=1 // pred_check_branch
      %809 = sbr.rel (0) target = $region53
    $region52: #{tpu_custom_call.1} parent=1 // pred_region
      %811 = vsyncadd [#allocation5], 0
      %s812 = sshll.u32 [#allocation8], 4
      %s813 = int_to_ptr.vmem [resolvable:$true] %s812
      %s814 = sshll.u32 %s10, 4
      %s815 = int_to_ptr.hbm [resolvable:$true] %s814
      %820 = dma.vmem_to_hbm [thread:$0]  %s813, 1024, %s815, [#allocation5], 128, 128, 8
    $region53: #{tpu_custom_call.1} parent=1 // pred_fallthru
      _
    // Predicated region
    $region54: #{tpu_custom_call.1} parent=1 // pred_check
      _
    $region55: #{tpu_custom_call.1} parent=1 // pred_check_branch
      %822 = sbr.rel (0) target = $region57
    $region56: #{tpu_custom_call.1} parent=1 // pred_region
      %824 = dma.done [#allocation5], 1024
    $region57: #{tpu_custom_call.1} parent=1 // pred_fallthru
      _
    %825 = vsyncpa [#allocation4], 1
    %826 = vsyncpa [#allocation5], 1
    %827 = vsyncpa [#allocation6], 1

</llo_original>
